<compile_context>
chip_gen: v7x
topology: tpu7x:2x2x1
jax: 0.10.0
libtpu: 0.0.40
codegen_flags: <defaults>
</compile_context>

<pallas_src>
import jax
import jax.numpy as jnp
from jax.experimental import pallas as pl
from jax.experimental.pallas import tpu as pltpu

_LANE = 128
_TARGET_BLOCK_BYTES = 4 * 1024 * 1024      # ~4 MiB per block (any dtype)
_VMEM_LIMIT_BYTES = 32 * 1024 * 1024       # > v5e's 16 MiB default, <= v7x's 64 MiB physical


def _round_up(a, b):
    return ((a + b - 1) // b) * b


def _round_down(a, b):
    return (a // b) * b


def _binary_kernel(x_ref, o_ref):
    x = x_ref[...]
    eps = jnp.asarray(1e-10, dtype=x.dtype)
    o_ref[...] = (x + eps) / x


def _binary_2d(x2):
    """Elementwise (x + 1e-10) / x on a lane-dense (rows, 128) slab."""
    rows, lanes = x2.shape
    assert lanes == _LANE
    dtype = x2.dtype
    itemsize = jnp.dtype(dtype).itemsize
    sublane = max(8, 32 // itemsize)                       # 8 f32 / 16 bf16 / 32 int8
    max_tile_rows = max(_TARGET_BLOCK_BYTES // (_LANE * itemsize), sublane)

    if rows <= sublane:
        # Tiny input: one full-array block (block == array dims is always legal).
        tile_rows = rows
    else:
        # Sublane-aligned, <= ~4 MiB, and >=2 grid steps when possible so
        # v7x's two TensorCores both get a share of the "parallel" axis.
        half = _round_up(pl.cdiv(rows, 2), sublane)
        tile_rows = min(max_tile_rows, half, _round_down(rows, sublane))

    grid = (pl.cdiv(rows, tile_rows),)
    # Ragged last block: Pallas pads out-of-bounds reads (kernel may compute
    # inf/NaN on the padding) and masks out-of-bounds writes -> no explicit
    # padding copies needed in the wrapper.
    return pl.pallas_call(
        _binary_kernel,
        out_shape=jax.ShapeDtypeStruct((rows, _LANE), dtype),
        grid=grid,
        in_specs=[pl.BlockSpec((tile_rows, _LANE), lambda i: (i, 0))],
        out_specs=pl.BlockSpec((tile_rows, _LANE), lambda i: (i, 0)),
        compiler_params=pltpu.CompilerParams(
            dimension_semantics=("parallel",),
            vmem_limit_bytes=_VMEM_LIMIT_BYTES,
        ),
    )(x2)


@jax.jit
def binary(x):
    """Pallas implementation of Binary.forward: (x + 1e-10) / x (any shape)."""
    orig_shape = x.shape
    dtype = x.dtype
    xf = x.reshape(-1)                       # free for a contiguous array
    n = xf.shape[0]
    n_main = _round_down(n, _LANE)
    rem = n - n_main

    if rem == 0:
        # Fast path: fully lane-aligned, zero extra HBM passes.
        return _binary_2d(xf.reshape(n_main // _LANE, _LANE)).reshape(orig_shape)

    # Rare slow path: element count not a multiple of 128.  Process the
    # lane-aligned bulk with the kernel and the <128-element tail in plain JAX
    # (no input padding pass; one small output-side concatenate).
    eps = jnp.asarray(1e-10, dtype=dtype)
    tail_in = xf[n_main:]
    tail = (tail_in + eps) / tail_in
    if n_main == 0:
        return tail.reshape(orig_shape)
    main = _binary_2d(xf[:n_main].reshape(n_main // _LANE, _LANE)).reshape(-1)
    return jnp.concatenate([main, tail]).reshape(orig_shape)


def binary_ref(x):
    """Pure-JAX reference of Binary.forward."""
    return (x + jnp.asarray(1e-10, dtype=x.dtype)) / x


if __name__ == "__main__":
    key = jax.random.PRNGKey(0)
    x = jax.random.normal(key, (2, 4, 16, 16), dtype=jnp.float32)

    y = binary(x)
    jax.block_until_ready(y)

    ref = binary_ref(x)
    assert y.shape == x.shape and y.dtype == x.dtype
    assert jnp.allclose(y, ref, rtol=1e-6, atol=0.0)

    # Non-128-divisible element count exercises the ragged/tail path.
    x2 = jax.random.normal(jax.random.PRNGKey(1), (3, 7, 11), dtype=jnp.float32) + 2.0
    y2 = binary(x2)
    jax.block_until_ready(y2)
    assert y2.shape == x2.shape and y2.dtype == x2.dtype
    assert jnp.allclose(y2, binary_ref(x2), rtol=1e-6, atol=0.0)

    print("KERNEL_OK")
</pallas_src>

<mosaic_0001>
module attributes {stable_mosaic.version = 11 : i64} {
  func.func @_binary_kernel(%arg0: i32, %arg1: memref<8x128xf32, #tpu.memory_space<vmem>>, %arg2: memref<8x128xf32, #tpu.memory_space<vmem>>) attributes {dimension_semantics = [#tpu.dimension_semantics<parallel>], iteration_bounds = array<i64: 2>, scalar_prefetch = 0 : i64, scratch_operands = 0 : i64, tpu.core_type = #tpu.core_type<tc>, window_params = [{transform_indices = @transform_0, window_bounds = array<i64: 8, 128>}, {transform_indices = @transform_1, window_bounds = array<i64: 8, 128>}]} {
    %c0 = arith.constant 0 : index
    %c0_0 = arith.constant 0 : index
    %0 = vector.load %arg1[%c0, %c0_0] : memref<8x128xf32, #tpu.memory_space<vmem>>, vector<8x128xf32>
    %cst = arith.constant 1.000000e-10 : f32
    %1 = vector.broadcast %cst : f32 to vector<8x128xf32>
    %2 = arith.addf %0, %1 : vector<8x128xf32>
    %3 = arith.divf %2, %0 : vector<8x128xf32>
    %c0_1 = arith.constant 0 : index
    %c0_2 = arith.constant 0 : index
    %4 = vector.load %arg2[%c0_1, %c0_2] : memref<8x128xf32, #tpu.memory_space<vmem>>, vector<8x128xf32>
    tpu.vector_store %arg2[%c0_1, %c0_2], %3 {strides = array<i32>} : memref<8x128xf32, #tpu.memory_space<vmem>>, vector<8x128xf32>,
    return
  }
  func.func @transform_0(%arg0: i32) -> (i32, i32) {
    %c0_i32 = arith.constant 0 : i32
    %c0_i32_0 = arith.constant 0 : i32
    return %arg0, %c0_i32 : i32, i32
  }
  func.func @transform_1(%arg0: i32) -> (i32, i32) {
    %c0_i32 = arith.constant 0 : i32
    %c0_i32_0 = arith.constant 0 : i32
    return %arg0, %c0_i32 : i32, i32
  }
}

</mosaic_0001>

<llo_original>
// kernel: binary.1
$region0: #{binary.1}
  #allocation0 [shape = 'u32[]', space=smem, size = 0x4, offset = 0x4, fixed_abs, tag = 'smem constant byte address 0x4 - core index']
  #allocation1 [shape = 'u32[144,128]{1,0:T(1,128)}', space=vmem, size = 0x12000, scoped, tag = 'internal scratch']
  %s0 = inlined_call_operand.vmem [shape: f32[16,128], index: 0, kind: input, shape index: {}]
  %s1 = inlined_call_operand.vmem [shape: f32[16,128], index: 1, kind: output, shape index: {}]
  %s2 = sld [smem:[#allocation0]]
  $region37: #{binary.1} parent=0
    _
  %s4 = ssub.s32 1, %s2
  %s5 = scalar_select 0, %s4, %s2
  loop: start=0, step=1, limit=4
  $region2: #{binary.1} parent=0 // loop_pre_header
    _
  $region3: #{binary.1} parent=0 // loop_header
    %s7 = sphi 0, %s11
    %p8 = scmp.ge.s32.totalorder %s7, 4
    %s17 = sphi 0, %s19
    %s20 = sphi 0, %s17
    %s21 = sphi 0, %s20
    %s37 = sphi 0, %s21
    %s43 = sphi 0, %s45
    %s46 = sphi 0, %s43
    %s47 = sphi 0, %s46
    %s63 = sphi 0, %s47
  $region4: #{binary.1} parent=0 // loop_header_branch
    %10 = sbr.rel (%p8) target = $region8
  $region5: #{binary.1} parent=0 // loop_body
    %s12 = ssub.s32 %s7, 1
    %s13 = ssub.s32 %s7, 2
    %s14 = sadd.s32 %s7, 1
    %s15 = ssub.s32 %s7, %s14
    %p16 = scmp.eq.s32.totalorder %s15, 0
    %s18 = sadd.s32 %s17, 1
    %s19 = scalar_select %p16, %s17, %s18
    %p22 = pneg %p16
    %p23 = scmp.eq.s32.totalorder %s7, 1
    %p24 = por %p22, %p23
    %p25 = scmp.ne.s32.totalorder %s17, %s20
    %p26 = scmp.eq.s32.totalorder %s7, 0
    %p27 = por %p25, %p26
    %p28 = scmp.ne.s32.totalorder %s17, %s20
    %p29 = scmp.eq.s32.totalorder %s12, 1
    %p30 = por %p28, %p29
    %p31 = scmp.ne.s32.totalorder %s20, %s21
    %p32 = scmp.eq.s32.totalorder %s12, 0
    %p33 = por %p31, %p32
    %p34 = scmp.ne.s32.totalorder %s20, %s21
    %p35 = scmp.eq.s32.totalorder %s13, 1
    %p36 = por %p34, %p35
    %p38 = scmp.ne.s32.totalorder %s21, %s37
    %p39 = scmp.eq.s32.totalorder %s13, 0
    %p40 = por %p38, %p39
    %s41 = ssub.s32 %s7, %s14
    %p42 = scmp.eq.s32.totalorder %s41, 0
    %s44 = sadd.s32 %s43, 1
    %s45 = scalar_select %p42, %s43, %s44
    %p48 = pneg %p42
    %p49 = scmp.eq.s32.totalorder %s7, 1
    %p50 = por %p48, %p49
    %p51 = scmp.ne.s32.totalorder %s43, %s46
    %p52 = scmp.eq.s32.totalorder %s7, 0
    %p53 = por %p51, %p52
    %p54 = scmp.ne.s32.totalorder %s43, %s46
    %p55 = scmp.eq.s32.totalorder %s12, 1
    %p56 = por %p54, %p55
    %p57 = scmp.ne.s32.totalorder %s46, %s47
    %p58 = scmp.eq.s32.totalorder %s12, 0
    %p59 = por %p57, %p58
    %p60 = scmp.ne.s32.totalorder %s46, %s47
    %p61 = scmp.eq.s32.totalorder %s13, 1
    %p62 = por %p60, %p61
    %p64 = scmp.ne.s32.totalorder %s47, %s63
    %p65 = scmp.eq.s32.totalorder %s13, 0
    %p66 = por %p64, %p65
    %p67 = scmp.le.s32.totalorder 1, %s7
    %p68 = scmp.lt.s32.totalorder %s7, 3
    %p69 = pnand %p67, %p68
    %p70 = pneg %p69
    // Predicated region
    $region9: #{binary.1} parent=5 // pred_check
      _
    $region10: #{binary.1} parent=5 // pred_check_branch
      %72 = sbr.rel (%p69) target = $region12
    $region11: #{binary.1} parent=5 // pred_region
      %s73 = ssub.s32 %s7, 1
    $region12: #{binary.1} parent=5 // pred_fallthru
      _
    %p74 = scmp.lt.s32.totalorder %s7, 2
    // Predicated region
    $region13: #{binary.1} parent=5 // pred_check
      %p75 = pneg %p74
    $region14: #{binary.1} parent=5 // pred_check_branch
      %77 = sbr.rel (%p75) target = $region16
    $region15: #{binary.1} parent=5 // pred_region
      // Predicated region
      $region17: #{binary.1} parent=15 // pred_check
        %p78 = pneg %p27
      $region18: #{binary.1} parent=15 // pred_check_branch
        %80 = sbr.rel (%p78) target = $region20
      $region19: #{binary.1} parent=15 // pred_region
        %p81 = scmp.lt.s32.totalorder %s7, 1
        %s82 = scalar_select %p81, %s7, 1
        %s83 = smul.addr %s82, 8
        %s84 = scalar_lea.vmem %s0, %s83
      $region20: #{binary.1} parent=15 // pred_fallthru
        _
    $region16: #{binary.1} parent=5 // pred_fallthru
      _
    %p85 = scmp.le.s32.totalorder 1, %s7
    %p86 = scmp.lt.s32.totalorder %s7, 3
    %p87 = pnand %p85, %p86
    %p88 = pneg %p87
    // Predicated region
    $region21: #{binary.1} parent=5 // pred_check
      _
    $region22: #{binary.1} parent=5 // pred_check_branch
      %90 = sbr.rel (%p87) target = $region24
    $region23: #{binary.1} parent=5 // pred_region
      %s91 = ssub.s32 %s7, 1
      %p92 = scmp.lt.s32.totalorder %s12, 1
      %s93 = scalar_select %p92, %s12, 1
      %s94 = smul.addr %s93, 8
      %s95 = scalar_lea.vmem %s0, %s94
      %p96 = pneg %p33
      %p97 = pneg %p30
      %p98 = pneg %p59
      %p99 = pneg %p56
      %p100 = scmp.lt.s32.totalorder %s12, 1
      %s101 = scalar_select %p100, %s12, 1
      %s102 = smul.addr %s101, 8
      %s103 = scalar_lea.vmem %s1, %s102
      %p104 = scmp.lt.s32.totalorder %s12, 1
      %s105 = scalar_select %p104, %s12, 1
      %s106 = smul.addr %s105, 8
      %s107 = scalar_lea.vmem %s0, %s106
      %p108 = scmp.lt.s32.totalorder %s12, 1
      %s109 = scalar_select %p108, %s12, 1
      %s110 = smul.addr %s109, 8
      %s111 = scalar_lea.vmem %s1, %s110
      %v112 = vld [vmem:[%s107] sm:$0xff]
      %v113 = vadd.f32 %v112, 1e-10
      %v114 = vrcp.pop %v112
      %v115 = vmul.f32 %v113, %v114
      %116 = vst [vmem:[%s111] sm:$0xff] %v115
      %p117 = scmp.lt.s32.totalorder %s12, 1
      %s118 = scalar_select %p117, %s12, 1
      %s119 = smul.addr %s118, 8
      %s120 = scalar_lea.vmem %s1, %s119
      // Predicated region
      $region25: #{binary.1} parent=23 // pred_check
        %p121 = pneg %p56
      $region26: #{binary.1} parent=23 // pred_check_branch
        %123 = sbr.rel (%p121) target = $region28
      $region27: #{binary.1} parent=23 // pred_region
        _
      $region28: #{binary.1} parent=23 // pred_fallthru
        _
    $region24: #{binary.1} parent=5 // pred_fallthru
      _
    %p124 = scmp.le.s32.totalorder 2, %s7
    // Predicated region
    $region29: #{binary.1} parent=5 // pred_check
      %p125 = pneg %p124
    $region30: #{binary.1} parent=5 // pred_check_branch
      %127 = sbr.rel (%p125) target = $region32
    $region31: #{binary.1} parent=5 // pred_region
      %s128 = ssub.s32 %s7, 2
      // Predicated region
      $region33: #{binary.1} parent=31 // pred_check
        %p129 = pneg %p62
      $region34: #{binary.1} parent=31 // pred_check_branch
        %131 = sbr.rel (%p129) target = $region36
      $region35: #{binary.1} parent=31 // pred_region
        %p132 = scmp.lt.s32.totalorder %s13, 1
        %s133 = scalar_select %p132, %s13, 1
        %s134 = smul.addr %s133, 8
        %s135 = scalar_lea.vmem %s1, %s134
      $region36: #{binary.1} parent=31 // pred_fallthru
        _
    $region32: #{binary.1} parent=5 // pred_fallthru
      _
  $region6: #{binary.1} parent=0 // loop_footer
    %s11 = sadd.s32 1, %s7
  $region7: #{binary.1} parent=0 // loop_footer_branch
    %6 = sbr.rel target = $region3
  $region8: #{binary.1} parent=0 // loop_exit
    _

</llo_original>
